<compile_context>
chip_gen: v5e
topology: v5e:2x2
jax: 0.10.0
libtpu: 0.0.40
codegen_flags: <defaults>
</compile_context>

<pallas_src>
import numpy as np
import jax
import jax.numpy as jnp
from jax.experimental import pallas as pl
from jax.experimental.pallas import tpu as pltpu


def make_positional_encoding(d_model: int, max_seq_len: int = 150) -> jnp.ndarray:
    """Deterministic pe table, same math as the PyTorch __init__ (handles odd d_model)."""
    position = np.arange(max_seq_len, dtype=np.float32)[:, None]              # (S_max, 1)
    div_term = np.exp(np.arange(0, d_model, 2, dtype=np.float32)
                      * (-np.log(10000.0) / d_model))                         # (ceil(D/2),)
    angles = position * div_term                                              # (S_max, ceil(D/2))
    pe = np.zeros((max_seq_len, d_model), dtype=np.float32)
    pe[:, 0::2] = np.sin(angles)
    pe[:, 1::2] = np.cos(angles[:, : d_model // 2])
    return jnp.asarray(pe)


def _pe_add_kernel(x_ref, pe_ref, o_ref):
    # Pure VPU elementwise add; broadcast over the leading (batch) dim.
    # Works for both layouts:
    #   (bt, row) + (1, row)      (lane-packed path)
    #   (bt, st, D) + (st, D)     (3-D path)
    o_ref[...] = x_ref[...] + pe_ref[...]


# Below this total size the add is left to XLA (fusion beats a standalone kernel).
_ROOFLINE_BYPASS_BYTES = 256 << 10


def _chip_cfg():
    """(target_tile_bytes, num_tensorcores) for the current chip; safe fallback."""
    try:
        kind = jax.devices()[0].device_kind.lower()
    except Exception:
        kind = ""
    if "v7" in kind:
        # v7x: ~3.2 TB/s HBM per TC -> 4 MiB tiles keep the ~0.35 us/step overhead
        # under ~10%; double-buffered in+out (~16-17 MiB) fits the 32 MiB scoped
        # VMEM default and 64 MiB physical VMEM.  2 TensorCores per chip.
        return 4 << 20, 2
    # v5e/v6e: 2 MiB tiles are already near roofline and double-buffered in+out
    # (~8-9 MiB) stays under v5e's 16 MiB default scoped-VMEM limit.  1 TC.
    return 2 << 20, 1


def _batch_tile_2d(batch: int, row_bytes: int, target: int, n_tc: int) -> int:
    """Lane-packed (B, S*D) path: bt is the second-to-last block dim, so a
    partial-batch block must be a multiple of 8 (or span the whole batch)."""
    bt = max(1, target // max(row_bytes, 1))
    if bt < batch:
        return max(8, (bt // 8) * 8) if batch > 8 else batch
    # Whole batch fits one tile: only split when a second TensorCore exists and
    # the split stays (8,128)-legal.
    if n_tc > 1 and batch % 2 == 0 and (batch // 2) % 8 == 0:
        return batch // 2
    return batch


def _tiles_3d(batch: int, seq: int, d: int, itemsize: int, target: int, n_tc: int):
    """3-D (bt, st, D) path: bt is the leading block dim (no (8,128) rule);
    st (second-to-last) must be a multiple of 8 or span S; D spans the full dim."""
    row_bytes = seq * d * itemsize
    if row_bytes <= target:
        bt = max(1, min(batch, target // max(row_bytes, 1)))
        if n_tc > 1 and batch >= 2:
            # Give each TensorCore work; aim for >=2 steps per core when B allows.
            want_steps = 2 * n_tc if batch >= 2 * n_tc else n_tc
            bt = max(1, min(bt, -(-batch // want_steps)))
        return bt, seq
    # A single batch row exceeds the target: tile the sequence axis instead.
    seqrow_bytes = d * itemsize
    st = max(8, ((target // max(seqrow_bytes, 1)) // 8) * 8)
    st = min(st, seq)          # st == seq (full extent) if seq < 8: still legal
    return 1, st


def positional_encoding_forward(
    x: jnp.ndarray,
    pe: jnp.ndarray,
    *,
    donate_x: bool = False,
    min_pallas_bytes: int = _ROOFLINE_BYPASS_BYTES,
) -> jnp.ndarray:
    """x: (B, S, D);  pe: (max_seq_len, D).  Returns x + pe[:S][None, :, :]."""
    B, S, D = x.shape
    itemsize = jnp.dtype(x.dtype).itemsize
    pe_s = pe[:S, :].astype(x.dtype)   # one-time tiny slice; see dtype note in header

    if B * S * D * itemsize < min_pallas_bytes:
        # Tiny input: a standalone kernel would only add launch overhead and an
        # un-fusable HBM round-trip; let XLA fuse the add.
        return x + pe_s[None, :, :]

    target, n_tc = _chip_cfg()
    alias = {0: 0} if donate_x else {}
    row_bytes = S * D * itemsize

    # Lane-packed path for small / odd d_model: pack (S, D) into the lane axis so
    # stores are full-width vst instead of masked vst.msk on quarter-filled vregs.
    # Only when an 8-row tile (the minimum legal partial-batch tile) fits the
    # target; otherwise fall through to the S-tiled 3-D path (still legal for any
    # D because D spans the full array dim).
    if D % 128 != 0 and 8 * row_bytes <= target:
        row = S * D
        x2 = x.reshape(B, row)            # metadata-only reshape
        pe2 = pe_s.reshape(1, row)
        bt = _batch_tile_2d(B, row_bytes, target, n_tc)
        out2 = pl.pallas_call(
            _pe_add_kernel,
            out_shape=jax.ShapeDtypeStruct((B, row), x.dtype),
            grid=(pl.cdiv(B, bt),),
            in_specs=[
                pl.BlockSpec((bt, row), lambda b: (b, 0)),
                pl.BlockSpec((1, row), lambda b: (0, 0)),   # constant index: fetched once
            ],
            out_specs=pl.BlockSpec((bt, row), lambda b: (b, 0)),
            compiler_params=pltpu.CompilerParams(dimension_semantics=("parallel",)),
            input_output_aliases=alias,
        )(x2, pe2)
        return out2.reshape(B, S, D)

    # 3-D path: lane-dense d_model (multiple of 128) or very long sequences.
    bt, st = _tiles_3d(B, S, D, itemsize, target, n_tc)
    return pl.pallas_call(
        _pe_add_kernel,
        out_shape=jax.ShapeDtypeStruct((B, S, D), x.dtype),
        grid=(pl.cdiv(B, bt), pl.cdiv(S, st)),
        in_specs=[
            pl.BlockSpec((bt, st, D), lambda b, s: (b, s, 0)),
            pl.BlockSpec((st, D), lambda b, s: (s, 0)),
        ],
        out_specs=pl.BlockSpec((bt, st, D), lambda b, s: (b, s, 0)),
        compiler_params=pltpu.CompilerParams(
            dimension_semantics=("parallel", "parallel")),
        input_output_aliases=alias,
    )(x, pe_s)


if __name__ == "__main__":
    MAX_SEQ_LEN = 150

    # Case 1: module's shipped config (B=2, S=8, D=32) — takes the tiny-input
    # bypass (plain JAX add; XLA fuses it in a real model).
    B, S, D = 2, 8, 32
    x = jax.random.normal(jax.random.PRNGKey(0), (B, S, D), dtype=jnp.float32)
    pe = make_positional_encoding(D, MAX_SEQ_LEN)
    ref = x + pe[None, :S, :]
    out = jax.block_until_ready(positional_encoding_forward(x, pe))
    np.testing.assert_allclose(np.asarray(out), np.asarray(ref), rtol=1e-6, atol=1e-6)

    # Case 2: force the lane-packed Pallas path at the same small odd-D shape.
    out_p = jax.block_until_ready(
        positional_encoding_forward(x, pe, min_pallas_bytes=0))
    np.testing.assert_allclose(np.asarray(out_p), np.asarray(ref), rtol=1e-6, atol=1e-6)

    # Case 3: force the 3-D lane-dense path (D multiple of 128, 2-D grid).
    B2, S2, D2 = 4, 16, 128
    x2 = jax.random.normal(jax.random.PRNGKey(0), (B2, S2, D2), dtype=jnp.float32)
    pe2 = make_positional_encoding(D2, MAX_SEQ_LEN)
    ref2 = x2 + pe2[None, :S2, :]
    out2 = jax.block_until_ready(
        positional_encoding_forward(x2, pe2, min_pallas_bytes=0))
    np.testing.assert_allclose(np.asarray(out2), np.asarray(ref2), rtol=1e-6, atol=1e-6)

    print("KERNEL_OK")
</pallas_src>

<mosaic_0001>
module attributes {stable_mosaic.version = 11 : i64} {
  func.func @_pe_add_kernel(%arg0: i32, %arg1: memref<2x256xf32, #tpu.memory_space<vmem>>, %arg2: memref<1x256xf32, #tpu.memory_space<vmem>>, %arg3: memref<2x256xf32, #tpu.memory_space<vmem>>) attributes {dimension_semantics = [#tpu.dimension_semantics<parallel>], iteration_bounds = array<i64: 1>, scalar_prefetch = 0 : i64, scratch_operands = 0 : i64, tpu.core_type = #tpu.core_type<tc>, window_params = [{transform_indices = @transform_0, window_bounds = array<i64: 2, 256>}, {pipeline_mode = #tpu.pipeline_mode<synchronous>, transform_indices = @transform_1, window_bounds = array<i64: 1, 256>}, {transform_indices = @transform_2, window_bounds = array<i64: 2, 256>}]} {
    %c0 = arith.constant 0 : index
    %c0_0 = arith.constant 0 : index
    %0 = vector.load %arg1[%c0, %c0_0] : memref<2x256xf32, #tpu.memory_space<vmem>>, vector<2x256xf32>
    %c0_1 = arith.constant 0 : index
    %c0_2 = arith.constant 0 : index
    %1 = vector.load %arg2[%c0_1, %c0_2] : memref<1x256xf32, #tpu.memory_space<vmem>>, vector<1x256xf32>
    %2 = vector.broadcast %1 : vector<1x256xf32> to vector<2x256xf32>
    %3 = arith.addf %0, %2 : vector<2x256xf32>
    %c0_3 = arith.constant 0 : index
    %c0_4 = arith.constant 0 : index
    %4 = vector.load %arg3[%c0_3, %c0_4] : memref<2x256xf32, #tpu.memory_space<vmem>>, vector<2x256xf32>
    tpu.vector_store %arg3[%c0_3, %c0_4], %3 {strides = array<i32>} : memref<2x256xf32, #tpu.memory_space<vmem>>, vector<2x256xf32>,
    return
  }
  func.func @transform_0(%arg0: i32) -> (i32, i32) {
    %c0_i32 = arith.constant 0 : i32
    %c0_i32_0 = arith.constant 0 : i32
    return %arg0, %c0_i32 : i32, i32
  }
  func.func @transform_1(%arg0: i32) -> (i32, i32) {
    %c0_i32 = arith.constant 0 : i32
    %c0_i32_0 = arith.constant 0 : i32
    %c0_i32_1 = arith.constant 0 : i32
    return %c0_i32, %c0_i32_0 : i32, i32
  }
  func.func @transform_2(%arg0: i32) -> (i32, i32) {
    %c0_i32 = arith.constant 0 : i32
    %c0_i32_0 = arith.constant 0 : i32
    return %arg0, %c0_i32 : i32, i32
  }
}

</mosaic_0001>

<llo_original>
// kernel: tpu_custom_call.1
$region0: #{tpu_custom_call.1}
  #allocation0 [shape = 'u32[]', space=smem, size = 0x4, offset = 0x4, fixed_abs, tag = 'smem constant byte address 0x4 - core index']
  #allocation1 [shape = 'u32[72,128]{1,0:T(1,128)}', space=vmem, size = 0x9000, scoped, tag = 'internal scratch']
  %s0 = inlined_call_operand.hbm [shape: f32[2,256], index: 0, kind: input, shape index: {}]
  %s1 = inlined_call_operand.hbm [shape: f32[1,256], index: 1, kind: input, shape index: {}]
  %s2 = inlined_call_operand.hbm [shape: f32[2,256], index: 2, kind: output, shape index: {}]
  %s3 = sld [smem:[#allocation0]]
  $region26: #{tpu_custom_call.1} parent=0
    _
  %s5 = ssub.s32 1, %s3
  %s6 = scalar_select 0, %s5, %s3
  $region1: #{tpu_custom_call.1} parent=0
    #allocation2 [shape = 'u8[2048]{0}', space=vmem, size = 0x800, scoped, tag = 'input window, operand 0, single buffered']
    #allocation3 [shape = 's32[1]{0}', space=sflag, size = 0x4, scoped, tag = 'scoped memory for tpu_custom_call.1']
    #allocation4 [shape = 's32[1]{0}', space=sflag, size = 0x4, scoped, tag = 'scoped memory for tpu_custom_call.1']
    #allocation5 [shape = 'u8[1024]{0}', space=vmem, size = 0x400, scoped, tag = 'input window, operand 1, single buffered']
    #allocation6 [shape = 's32[1]{0}', space=sflag, size = 0x4, scoped, tag = 'scoped memory for tpu_custom_call.1']
    #allocation7 [shape = 'u8[2048]{0}', space=vmem, size = 0x800, scoped, tag = 'output window, operand 0, single buffered']
    %7 = vsyncpa [#allocation3], 0
    %8 = vsyncpa [#allocation6], 0
    %9 = vsyncpa [#allocation4], 0
    // Predicated region
    $region2: #{tpu_custom_call.1} parent=1 // pred_check
      _
    $region3: #{tpu_custom_call.1} parent=1 // pred_check_branch
      %11 = sbr.rel (0) target = $region5
    $region4: #{tpu_custom_call.1} parent=1 // pred_region
      %13 = vsyncadd [#allocation3], 0
      %s15 = sshll.u32 %s0, 4
      %s16 = int_to_ptr.hbm [resolvable:$true] %s15
      %s17 = sshll.u32 [#allocation2], 4
      %s18 = int_to_ptr.vmem [resolvable:$true] %s17
      %20 = dma.hbm_to_vmem [thread:$0]  %s16, 64, %s18, [#allocation3]
    $region5: #{tpu_custom_call.1} parent=1 // pred_fallthru
      _
    // Predicated region
    $region6: #{tpu_custom_call.1} parent=1 // pred_check
      _
    $region7: #{tpu_custom_call.1} parent=1 // pred_check_branch
      %22 = sbr.rel (0) target = $region9
    $region8: #{tpu_custom_call.1} parent=1 // pred_region
      %24 = vsyncadd [#allocation6], 0
      %s26 = sshll.u32 %s1, 4
      %s27 = int_to_ptr.hbm [resolvable:$true] %s26
      %s28 = sshll.u32 [#allocation5], 4
      %s29 = int_to_ptr.vmem [resolvable:$true] %s28
      %31 = dma.hbm_to_vmem [thread:$0]  %s27, 32, %s29, [#allocation6]
    $region9: #{tpu_custom_call.1} parent=1 // pred_fallthru
      _
    // Predicated region
    $region10: #{tpu_custom_call.1} parent=1 // pred_check
      _
    $region11: #{tpu_custom_call.1} parent=1 // pred_check_branch
      %33 = sbr.rel (0) target = $region13
    $region12: #{tpu_custom_call.1} parent=1 // pred_region
      %35 = dma.done [#allocation3], 64
    $region13: #{tpu_custom_call.1} parent=1 // pred_fallthru
      _
    // Predicated region
    $region14: #{tpu_custom_call.1} parent=1 // pred_check
      _
    $region15: #{tpu_custom_call.1} parent=1 // pred_check_branch
      %37 = sbr.rel (0) target = $region17
    $region16: #{tpu_custom_call.1} parent=1 // pred_region
      %39 = dma.done [#allocation6], 32
    $region17: #{tpu_custom_call.1} parent=1 // pred_fallthru
      _
    %v40 = vld [vmem:[#allocation2] sm:$0xf]
    %v41 = vld [vmem:[#allocation5] sm:$0x3]
    %v43 = vperm.slane %v41, 0
    %v44 = vperm.slane %v41, 1
    %v45 = vrot.slane %v44, 6
    %vm46 = vcmask 1041408
    %v47 = vsel %vm46, %v43, %v45
    %v49 = vadd.f32 %v40, %v47
    %50 = vst [vmem:[#allocation7] sm:$0xf] %v49
    // Predicated region
    $region18: #{tpu_custom_call.1} parent=1 // pred_check
      _
    $region19: #{tpu_custom_call.1} parent=1 // pred_check_branch
      %52 = sbr.rel (0) target = $region21
    $region20: #{tpu_custom_call.1} parent=1 // pred_region
      %54 = vsyncadd [#allocation4], 0
      %s56 = sshll.u32 [#allocation7], 4
      %s57 = int_to_ptr.vmem [resolvable:$true] %s56
      %s58 = sshll.u32 %s2, 4
      %s59 = int_to_ptr.hbm [resolvable:$true] %s58
      %61 = dma.vmem_to_hbm [thread:$0]  %s57, 64, %s59, [#allocation4]
    $region21: #{tpu_custom_call.1} parent=1 // pred_fallthru
      _
    // Predicated region
    $region22: #{tpu_custom_call.1} parent=1 // pred_check
      _
    $region23: #{tpu_custom_call.1} parent=1 // pred_check_branch
      %63 = sbr.rel (0) target = $region25
    $region24: #{tpu_custom_call.1} parent=1 // pred_region
      %65 = dma.done [#allocation4], 64
    $region25: #{tpu_custom_call.1} parent=1 // pred_fallthru
      _
    %66 = vsyncpa [#allocation3], 1
    %67 = vsyncpa [#allocation6], 1
    %68 = vsyncpa [#allocation4], 1

</llo_original>
